<compile_context>
chip_gen: v7x
topology: tpu7x:2x2x1
jax: 0.10.0
libtpu: 0.0.40
codegen_flags: <defaults>
</compile_context>

<pallas_src>
import functools

import jax
import jax.numpy as jnp
from jax.experimental import pallas as pl
from jax.experimental.pallas import tpu as pltpu

_NEG_INF = -1e30  # bias for padded logit columns -> exp underflows to 0


def _round_up(n, m):
    return (n + m - 1) // m * m


def classifier_kernel(x_ref, w1_ref, b1_ref, w2_ref, b2_ref, o_ref):
    # hidden = relu(x @ W1 + b1)   (MXU matmul, f32 accumulation)
    h = jnp.dot(x_ref[...], w1_ref[...], preferred_element_type=jnp.float32)
    h = jnp.maximum(h + b1_ref[...], 0.0)

    # logits = h @ W2 + b2  (padded output columns have bias -1e30)
    logits = jnp.dot(h.astype(w2_ref.dtype), w2_ref[...],
                     preferred_element_type=jnp.float32)
    logits = logits + b2_ref[...]

    # numerically-stable softmax over the lane-dense (padded) last axis, in f32
    m = jnp.max(logits, axis=-1, keepdims=True)
    e = jnp.exp(logits - m)
    denom = jnp.sum(e, axis=-1, keepdims=True)
    # approx=False keeps row sums bit-tight (approx=True also works, looser tol)
    o_ref[...] = (e * pl.reciprocal(denom, approx=False)).astype(o_ref.dtype)


@functools.partial(jax.jit, static_argnames=("tile_b", "compute_dtype"))
def classifier_forward(x, w1, b1, w2, b2, *, tile_b=512,
                       compute_dtype=jnp.float32):
    """softmax(relu(x @ W1 + b1) @ W2 + b2, axis=-1).

    x:  (B, x_dim)
    w1: (x_dim, h_dim)  (PyTorch dense.weight transposed)
    b1: (h_dim,) or (1, h_dim)
    w2: (h_dim, y_dim)  (PyTorch logits.weight transposed)
    b2: (y_dim,) or (1, y_dim)
    Returns (B, y_dim) float32.
    """
    B, x_dim = x.shape
    h_dim = w1.shape[1]
    y_dim = w2.shape[1]

    b1 = jnp.reshape(b1, (1, h_dim)).astype(jnp.float32)
    b2 = jnp.reshape(b2, (1, y_dim)).astype(jnp.float32)

    # Lane-pad hidden / output dims to 128 (zero pads keep math identical,
    # padded logit columns get a huge negative bias so softmax mass ~ 0).
    h_pad = _round_up(h_dim, 128)
    y_pad = _round_up(y_dim, 128)

    w1p = jnp.pad(w1, ((0, 0), (0, h_pad - h_dim))).astype(compute_dtype)
    b1p = jnp.pad(b1, ((0, 0), (0, h_pad - h_dim)))
    w2p = jnp.pad(w2, ((0, h_pad - h_dim), (0, y_pad - y_dim))).astype(compute_dtype)
    b2p = jnp.pad(b2, ((0, 0), (0, y_pad - y_dim)), constant_values=_NEG_INF)

    # Batch tiling: large tiles amortize per-step overhead and let the BlockSpec
    # pipeline double-buffer the x stream from HBM.
    tile_b = max(8, min(tile_b, _round_up(B, 8)))
    b_pad = _round_up(B, tile_b)
    xp = jnp.pad(x, ((0, b_pad - B), (0, 0))).astype(compute_dtype)

    grid = (b_pad // tile_b,)

    flops = 2 * b_pad * (x_dim * h_pad + h_pad * y_pad)
    bytes_accessed = (
        xp.size * xp.dtype.itemsize
        + w1p.size * w1p.dtype.itemsize + b1p.size * b1p.dtype.itemsize
        + w2p.size * w2p.dtype.itemsize + b2p.size * b2p.dtype.itemsize
        + b_pad * y_pad * 4
    )

    out = pl.pallas_call(
        classifier_kernel,
        out_shape=jax.ShapeDtypeStruct((b_pad, y_pad), jnp.float32),
        grid_spec=pltpu.PrefetchScalarGridSpec(
            num_scalar_prefetch=0,
            grid=grid,
            in_specs=[
                pl.BlockSpec((tile_b, x_dim), lambda i: (i, 0)),  # streamed
                pl.BlockSpec((x_dim, h_pad), lambda i: (0, 0)),   # resident
                pl.BlockSpec((1, h_pad), lambda i: (0, 0)),       # resident
                pl.BlockSpec((h_pad, y_pad), lambda i: (0, 0)),   # resident
                pl.BlockSpec((1, y_pad), lambda i: (0, 0)),       # resident
            ],
            out_specs=pl.BlockSpec((tile_b, y_pad), lambda i: (i, 0)),
        ),
        compiler_params=pltpu.CompilerParams(
            dimension_semantics=("parallel",),  # megacore sharding on v7x
            vmem_limit_bytes=32 * 1024 * 1024,
        ),
        cost_estimate=pl.CostEstimate(
            flops=flops,
            transcendentals=b_pad * y_pad,
            bytes_accessed=bytes_accessed,
        ),
    )(xp, w1p, b1p, w2p, b2p)

    return out[:B, :y_dim]


def init_params(key, x_dim, h_dim, y_dim):
    """Deterministic init mimicking nn.Linear's U(-1/sqrt(fan_in), 1/sqrt(fan_in)).
    Weights are stored as (in, out) = PyTorch weight transposed."""
    k1, k2, k3, k4 = jax.random.split(key, 4)
    bound1 = 1.0 / jnp.sqrt(jnp.float32(x_dim))
    bound2 = 1.0 / jnp.sqrt(jnp.float32(h_dim))
    w1 = jax.random.uniform(k1, (x_dim, h_dim), jnp.float32, -bound1, bound1)
    b1 = jax.random.uniform(k2, (1, h_dim), jnp.float32, -bound1, bound1)
    w2 = jax.random.uniform(k3, (h_dim, y_dim), jnp.float32, -bound2, bound2)
    b2 = jax.random.uniform(k4, (1, y_dim), jnp.float32, -bound2, bound2)
    return w1, b1, w2, b2


if __name__ == "__main__":
    # Classifier(dims=[x_dim, h_dim, y_dim])
    x_dim, h_dim, y_dim = 32, 64, 10
    batch = 8

    key = jax.random.PRNGKey(0)
    kx, kp = jax.random.split(key)
    x = jax.random.normal(kx, (batch, x_dim), jnp.float32)
    w1, b1, w2, b2 = init_params(kp, x_dim, h_dim, y_dim)

    out = classifier_forward(x, w1, b1, w2, b2, tile_b=512)
    out = jax.block_until_ready(out)

    # reference check against plain JAX
    ref = jax.nn.softmax(jnp.maximum(x @ w1 + b1, 0.0) @ w2 + b2, axis=-1)

    assert out.shape == (batch, y_dim)
    assert jnp.allclose(jnp.sum(out, axis=-1), 1.0, atol=1e-5)
    assert jnp.allclose(out, ref, atol=1e-5, rtol=1e-5)

    print("KERNEL_OK")
</pallas_src>

<mosaic_0001>
module attributes {stable_mosaic.version = 11 : i64} {
  func.func @classifier_kernel(%arg0: i32, %arg1: memref<8x32xf32, #tpu.memory_space<vmem>>, %arg2: memref<32x128xf32, #tpu.memory_space<vmem>>, %arg3: memref<1x128xf32, #tpu.memory_space<vmem>>, %arg4: memref<128x128xf32, #tpu.memory_space<vmem>>, %arg5: memref<1x128xf32, #tpu.memory_space<vmem>>, %arg6: memref<8x128xf32, #tpu.memory_space<vmem>>) attributes {dimension_semantics = [#tpu.dimension_semantics<parallel>], iteration_bounds = array<i64: 1>, scalar_prefetch = 0 : i64, scratch_operands = 0 : i64, tpu.core_type = #tpu.core_type<tc>, window_params = [{transform_indices = @transform_0, window_bounds = array<i64: 8, 32>}, {pipeline_mode = #tpu.pipeline_mode<synchronous>, transform_indices = @transform_1, window_bounds = array<i64: 32, 128>}, {pipeline_mode = #tpu.pipeline_mode<synchronous>, transform_indices = @transform_2, window_bounds = array<i64: 1, 128>}, {pipeline_mode = #tpu.pipeline_mode<synchronous>, transform_indices = @transform_3, window_bounds = array<i64: 128, 128>}, {pipeline_mode = #tpu.pipeline_mode<synchronous>, transform_indices = @transform_4, window_bounds = array<i64: 1, 128>}, {transform_indices = @transform_5, window_bounds = array<i64: 8, 128>}]} {
    %c0 = arith.constant 0 : index
    %c0_0 = arith.constant 0 : index
    %0 = vector.load %arg1[%c0, %c0_0] : memref<8x32xf32, #tpu.memory_space<vmem>>, vector<8x32xf32>
    %c0_1 = arith.constant 0 : index
    %c0_2 = arith.constant 0 : index
    %1 = vector.load %arg2[%c0_1, %c0_2] : memref<32x128xf32, #tpu.memory_space<vmem>>, vector<32x128xf32>
    %cst = arith.constant dense<0.000000e+00> : vector<8x128xf32>
    %2 = tpu.matmul %0, %1, %cst {dimension_numbers = #tpu.dot_dimension_numbers<[1], [0], [0], [1], [0, 0, 1, 1], [], []>} : vector<8x32xf32>, vector<32x128xf32>, vector<8x128xf32> -> vector<8x128xf32>
    %c0_3 = arith.constant 0 : index
    %c0_4 = arith.constant 0 : index
    %3 = vector.load %arg3[%c0_3, %c0_4] : memref<1x128xf32, #tpu.memory_space<vmem>>, vector<1x128xf32>
    %4 = vector.broadcast %3 : vector<1x128xf32> to vector<8x128xf32>
    %5 = arith.addf %2, %4 : vector<8x128xf32>
    %cst_5 = arith.constant 0.000000e+00 : f32
    %6 = vector.broadcast %cst_5 : f32 to vector<8x128xf32>
    %7 = arith.maximumf %5, %6 : vector<8x128xf32>
    %c0_6 = arith.constant 0 : index
    %c0_7 = arith.constant 0 : index
    %8 = vector.load %arg4[%c0_6, %c0_7] : memref<128x128xf32, #tpu.memory_space<vmem>>, vector<128x128xf32>
    %cst_8 = arith.constant dense<0.000000e+00> : vector<8x128xf32>
    %9 = tpu.matmul %7, %8, %cst_8 {dimension_numbers = #tpu.dot_dimension_numbers<[1], [0], [0], [1], [0, 0, 1, 1], [], []>} : vector<8x128xf32>, vector<128x128xf32>, vector<8x128xf32> -> vector<8x128xf32>
    %c0_9 = arith.constant 0 : index
    %c0_10 = arith.constant 0 : index
    %10 = vector.load %arg5[%c0_9, %c0_10] : memref<1x128xf32, #tpu.memory_space<vmem>>, vector<1x128xf32>
    %11 = vector.broadcast %10 : vector<1x128xf32> to vector<8x128xf32>
    %12 = arith.addf %9, %11 : vector<8x128xf32>
    %cst_11 = arith.constant dense<0xFF800000> : vector<8xf32>
    %13 = vector.multi_reduction <maximumf>, %12, %cst_11 [1] : vector<8x128xf32> to vector<8xf32>
    %14 = vector.shape_cast %13 : vector<8xf32> to vector<8x1xf32>
    %15 = vector.broadcast %14 : vector<8x1xf32> to vector<8x128xf32>
    %16 = arith.subf %12, %15 : vector<8x128xf32>
    %17 = math.exp %16 : vector<8x128xf32>
    %cst_12 = arith.constant dense<0.000000e+00> : vector<8xf32>
    %18 = vector.multi_reduction <add>, %17, %cst_12 [1] : vector<8x128xf32> to vector<8xf32>
    %19 = vector.shape_cast %18 : vector<8xf32> to vector<8x1xf32>
    %20 = tpu.reciprocal %19 : vector<8x1xf32> -> vector<8x1xf32>
    %21 = vector.broadcast %20 : vector<8x1xf32> to vector<8x128xf32>
    %22 = arith.mulf %17, %21 : vector<8x128xf32>
    %c0_13 = arith.constant 0 : index
    %c0_14 = arith.constant 0 : index
    %23 = vector.load %arg6[%c0_13, %c0_14] : memref<8x128xf32, #tpu.memory_space<vmem>>, vector<8x128xf32>
    tpu.vector_store %arg6[%c0_13, %c0_14], %22 {strides = array<i32>} : memref<8x128xf32, #tpu.memory_space<vmem>>, vector<8x128xf32>,
    return
  }
  func.func @transform_0(%arg0: i32) -> (i32, i32) {
    %c0_i32 = arith.constant 0 : i32
    %c0_i32_0 = arith.constant 0 : i32
    return %arg0, %c0_i32 : i32, i32
  }
  func.func @transform_1(%arg0: i32) -> (i32, i32) {
    %c0_i32 = arith.constant 0 : i32
    %c0_i32_0 = arith.constant 0 : i32
    %c0_i32_1 = arith.constant 0 : i32
    return %c0_i32, %c0_i32_0 : i32, i32
  }
  func.func @transform_2(%arg0: i32) -> (i32, i32) {
    %c0_i32 = arith.constant 0 : i32
    %c0_i32_0 = arith.constant 0 : i32
    %c0_i32_1 = arith.constant 0 : i32
    return %c0_i32, %c0_i32_0 : i32, i32
  }
  func.func @transform_3(%arg0: i32) -> (i32, i32) {
    %c0_i32 = arith.constant 0 : i32
    %c0_i32_0 = arith.constant 0 : i32
    %c0_i32_1 = arith.constant 0 : i32
    return %c0_i32, %c0_i32_0 : i32, i32
  }
  func.func @transform_4(%arg0: i32) -> (i32, i32) {
    %c0_i32 = arith.constant 0 : i32
    %c0_i32_0 = arith.constant 0 : i32
    %c0_i32_1 = arith.constant 0 : i32
    return %c0_i32, %c0_i32_0 : i32, i32
  }
  func.func @transform_5(%arg0: i32) -> (i32, i32) {
    %c0_i32 = arith.constant 0 : i32
    %c0_i32_0 = arith.constant 0 : i32
    return %arg0, %c0_i32 : i32, i32
  }
}

</mosaic_0001>

<llo_original>
// kernel: classifier_forward.1
$region0: #{classifier_forward.1}
  #allocation0 [shape = 'u32[]', space=smem, size = 0x4, offset = 0x4, fixed_abs, tag = 'smem constant byte address 0x4 - core index']
  #allocation1 [shape = 'u32[144,128]{1,0:T(1,128)}', space=vmem, size = 0x12000, scoped, tag = 'internal scratch']
  %s0 = inlined_call_operand.vmem [shape: f32[8,32], index: 0, kind: input, shape index: {}]
  %s1 = inlined_call_operand.vmem [shape: f32[32,128], index: 1, kind: input, shape index: {}]
  %s2 = inlined_call_operand.vmem [shape: f32[1,128], index: 2, kind: input, shape index: {}]
  %s3 = inlined_call_operand.vmem [shape: f32[128,128], index: 3, kind: input, shape index: {}]
  %s4 = inlined_call_operand.vmem [shape: f32[1,128], index: 4, kind: input, shape index: {}]
  %s5 = inlined_call_operand.hbm [shape: f32[8,128], index: 5, kind: output, shape index: {}]
  %s6 = sld [smem:[#allocation0]]
  $region30: #{classifier_forward.1} parent=0
    _
  %s8 = ssub.s32 1, %s6
  %s9 = scalar_select 0, %s8, %s6
  $region1: #{classifier_forward.1} parent=0
    #allocation2 [shape = 'u8[4096]{0}', space=vmem, size = 0x1000, scoped, tag = 'output window, operand 0, single buffered']
    #allocation3 [shape = 's32[1]{0}', space=sflag, size = 0x4, scoped, tag = 'scoped memory for classifier_forward.1']
    %10 = vsyncpa [#allocation3], 0
    // Predicated region
    $region2: #{classifier_forward.1} parent=1 // pred_check
      _
    $region3: #{classifier_forward.1} parent=1 // pred_check_branch
      %12 = sbr.rel (0) target = $region5
    $region4: #{classifier_forward.1} parent=1 // pred_region
      _
    $region5: #{classifier_forward.1} parent=1 // pred_fallthru
      _
    // Predicated region
    $region6: #{classifier_forward.1} parent=1 // pred_check
      _
    $region7: #{classifier_forward.1} parent=1 // pred_check_branch
      %14 = sbr.rel (0) target = $region9
    $region8: #{classifier_forward.1} parent=1 // pred_region
      _
    $region9: #{classifier_forward.1} parent=1 // pred_fallthru
      _
    // Predicated region
    $region10: #{classifier_forward.1} parent=1 // pred_check
      _
    $region11: #{classifier_forward.1} parent=1 // pred_check_branch
      %16 = sbr.rel (0) target = $region13
    $region12: #{classifier_forward.1} parent=1 // pred_region
      _
    $region13: #{classifier_forward.1} parent=1 // pred_fallthru
      _
    // Predicated region
    $region14: #{classifier_forward.1} parent=1 // pred_check
      _
    $region15: #{classifier_forward.1} parent=1 // pred_check_branch
      %18 = sbr.rel (0) target = $region17
    $region16: #{classifier_forward.1} parent=1 // pred_region
      _
    $region17: #{classifier_forward.1} parent=1 // pred_fallthru
      _
    // Predicated region
    $region18: #{classifier_forward.1} parent=1 // pred_check
      _
    $region19: #{classifier_forward.1} parent=1 // pred_check_branch
      %20 = sbr.rel (0) target = $region21
    $region20: #{classifier_forward.1} parent=1 // pred_region
      _
    $region21: #{classifier_forward.1} parent=1 // pred_fallthru
      _
    %v21 = vld [vmem:[%s0] sm:$0xff]
    %v22 = vld [vmem:[%s1] sm:$0xff]
    %v23 = vld [vmem:[%s1 + $0x8] sm:$0xff]
    %v24 = vld [vmem:[%s1 + $0x10] sm:$0xff]
    %v25 = vld [vmem:[%s1 + $0x18] sm:$0xff]
    %v26 = vld [vmem:[%s2] sm:$0x1]
    %v28 = vlaneseq
    %v29 = vshrl.u32 %v28, 7
    %v30 = vsub.s32 0, %v29
    %v31 = vrot.slane %v26, %v30
    %vm33 = vcmask 261120
    %v35 = vsel %vm33, %v21, 0
    %37 = vmatprep.subr.mxu0 0.0
    %38 = vmatpush1.msra.mxu0 %v22
    %39 = vmatprep.subr.mxu0 0.0
    %40 = vmatpush1.msra.mxu0 %v23
    %41 = vmatprep.subr.mxu0 0.0
    %42 = vmatpush1.msra.mxu0 %v24
    %43 = vmatprep.subr.mxu0 0.0
    %44 = vmatpush1.msra.mxu0 %v25
    %45 = vmatprep.subr.mxu0 0.0
    %46 = vmatpush1.msra.mxu0 0.0
    %47 = vmatprep.subr.mxu0 0.0
    %48 = vmatpush1.msra.mxu0 0.0
    %49 = vmatprep.subr.mxu0 0.0
    %50 = vmatpush1.msra.mxu0 0.0
    %51 = vmatprep.subr.mxu0 0.0
    %52 = vmatpush1.msra.mxu0 0.0
    %53 = vmatprep.subr.mxu0 0.0
    %54 = vmatpush1.msra.mxu0 0.0
    %55 = vmatprep.subr.mxu0 0.0
    %56 = vmatpush1.msra.mxu0 0.0
    %57 = vmatprep.subr.mxu0 0.0
    %58 = vmatpush1.msra.mxu0 0.0
    %59 = vmatprep.subr.mxu0 0.0
    %60 = vmatpush1.msra.mxu0 0.0
    %61 = vmatprep.subr.mxu0 0.0
    %62 = vmatpush1.msra.mxu0 0.0
    %63 = vmatprep.subr.mxu0 0.0
    %64 = vmatpush1.msra.mxu0 0.0
    %65 = vmatprep.subr.mxu0 0.0
    %66 = vmatpush1.msra.mxu0 0.0
    %67 = vmatprep.subr.mxu0 0.0
    %68 = vmatpush1.msra.mxu0 0.0
    %69 = vmatprep.subr.mxu0 0.0
    %70 = vmatpush1.msra.mxu0 0.0
    %71 = vmatprep.subr.mxu0 0.0
    %72 = vmatpush1.msra.mxu0 0.0
    %73 = vmatprep.subr.mxu0 0.0
    %74 = vmatpush1.msra.mxu0 0.0
    %75 = vmatprep.subr.mxu0 0.0
    %76 = vmatpush1.msra.mxu0 0.0
    %77 = vmatprep.subr.mxu0 0.0
    %78 = vmatpush1.msra.mxu0 0.0
    %79 = vmatprep.subr.mxu0 0.0
    %80 = vmatpush1.msra.mxu0 0.0
    %81 = vmatprep.subr.mxu0 0.0
    %82 = vmatpush1.msra.mxu0 0.0
    %83 = vmatprep.subr.mxu0 0.0
    %84 = vmatpush1.msra.mxu0 0.0
    %85 = vmatprep.subr.mxu0 0.0
    %86 = vmatpush1.msra.mxu0 0.0
    %87 = vmatprep.subr.mxu0 0.0
    %88 = vmatpush1.msra.mxu0 0.0
    %89 = vmatprep.subr.mxu0 0.0
    %90 = vmatpush1.msra.mxu0 0.0
    %91 = vmatprep.subr.mxu0 0.0
    %92 = vmatpush1.msra.mxu0 0.0
    %93 = vmatprep.subr.mxu0 0.0
    %94 = vmatpush1.msra.mxu0 0.0
    %95 = vmatprep.subr.mxu0 0.0
    %96 = vmatpush1.msra.mxu0 0.0
    %97 = vmatprep.subr.mxu0 0.0
    %98 = vmatpush1.msra.mxu0 0.0
    %99 = vmatprep.subr.mxu0 0.0
    %100 = vmatpush1.msra.mxu0 0.0
    %101 = vmatprep.mubr.f32.mxu0 0.0
    %102 = vmatmul.mubr.f32.gmra.mrb[0].mxu0 %v35
    %v103 = vpop.f32.mrb[0].mxu0
    %v104 = vadd.f32 %v31, %v103
    %v105 = vpop.f32.mrb[0].mxu0
    %106 = vdwg.mxu0
    %v107 = vmax.f32 %v104, 0.0
    %v108 = vld [vmem:[%s3] sm:$0xff]
    %v109 = vld [vmem:[%s3 + $0x8] sm:$0xff]
    %v110 = vld [vmem:[%s3 + $0x10] sm:$0xff]
    %v111 = vld [vmem:[%s3 + $0x18] sm:$0xff]
    %v112 = vld [vmem:[%s3 + $0x20] sm:$0xff]
    %v113 = vld [vmem:[%s3 + $0x28] sm:$0xff]
    %v114 = vld [vmem:[%s3 + $0x30] sm:$0xff]
    %v115 = vld [vmem:[%s3 + $0x38] sm:$0xff]
    %v116 = vld [vmem:[%s3 + $0x40] sm:$0xff]
    %v117 = vld [vmem:[%s3 + $0x48] sm:$0xff]
    %v118 = vld [vmem:[%s3 + $0x50] sm:$0xff]
    %v119 = vld [vmem:[%s3 + $0x58] sm:$0xff]
    %v120 = vld [vmem:[%s3 + $0x60] sm:$0xff]
    %v121 = vld [vmem:[%s3 + $0x68] sm:$0xff]
    %v122 = vld [vmem:[%s3 + $0x70] sm:$0xff]
    %v123 = vld [vmem:[%s3 + $0x78] sm:$0xff]
    %v124 = vld [vmem:[%s4] sm:$0x1]
    %v126 = vlaneseq
    %v127 = vshrl.u32 %v126, 7
    %v128 = vsub.s32 0, %v127
    %v129 = vrot.slane %v124, %v128
    %131 = vmatprep.subr.mxu0 0.0
    %132 = vmatpush1.msra.mxu0 %v108
    %133 = vmatprep.subr.mxu0 0.0
    %134 = vmatpush1.msra.mxu0 %v109
    %135 = vmatprep.subr.mxu0 0.0
    %136 = vmatpush1.msra.mxu0 %v110
    %137 = vmatprep.subr.mxu0 0.0
    %138 = vmatpush1.msra.mxu0 %v111
    %139 = vmatprep.subr.mxu0 0.0
    %140 = vmatpush1.msra.mxu0 %v112
    %141 = vmatprep.subr.mxu0 0.0
    %142 = vmatpush1.msra.mxu0 %v113
    %143 = vmatprep.subr.mxu0 0.0
    %144 = vmatpush1.msra.mxu0 %v114
    %145 = vmatprep.subr.mxu0 0.0
    %146 = vmatpush1.msra.mxu0 %v115
    %147 = vmatprep.subr.mxu0 0.0
    %148 = vmatpush1.msra.mxu0 %v116
    %149 = vmatprep.subr.mxu0 0.0
    %150 = vmatpush1.msra.mxu0 %v117
    %151 = vmatprep.subr.mxu0 0.0
    %152 = vmatpush1.msra.mxu0 %v118
    %153 = vmatprep.subr.mxu0 0.0
    %154 = vmatpush1.msra.mxu0 %v119
    %155 = vmatprep.subr.mxu0 0.0
    %156 = vmatpush1.msra.mxu0 %v120
    %157 = vmatprep.subr.mxu0 0.0
    %158 = vmatpush1.msra.mxu0 %v121
    %159 = vmatprep.subr.mxu0 0.0
    %160 = vmatpush1.msra.mxu0 %v122
    %161 = vmatprep.subr.mxu0 0.0
    %162 = vmatpush1.msra.mxu0 %v123
    %163 = vmatprep.subr.mxu0 0.0
    %164 = vmatpush1.msra.mxu0 0.0
    %165 = vmatprep.subr.mxu0 0.0
    %166 = vmatpush1.msra.mxu0 0.0
    %167 = vmatprep.subr.mxu0 0.0
    %168 = vmatpush1.msra.mxu0 0.0
    %169 = vmatprep.subr.mxu0 0.0
    %170 = vmatpush1.msra.mxu0 0.0
    %171 = vmatprep.subr.mxu0 0.0
    %172 = vmatpush1.msra.mxu0 0.0
    %173 = vmatprep.subr.mxu0 0.0
    %174 = vmatpush1.msra.mxu0 0.0
    %175 = vmatprep.subr.mxu0 0.0
    %176 = vmatpush1.msra.mxu0 0.0
    %177 = vmatprep.subr.mxu0 0.0
    %178 = vmatpush1.msra.mxu0 0.0
    %179 = vmatprep.subr.mxu0 0.0
    %180 = vmatpush1.msra.mxu0 0.0
    %181 = vmatprep.subr.mxu0 0.0
    %182 = vmatpush1.msra.mxu0 0.0
    %183 = vmatprep.subr.mxu0 0.0
    %184 = vmatpush1.msra.mxu0 0.0
    %185 = vmatprep.subr.mxu0 0.0
    %186 = vmatpush1.msra.mxu0 0.0
    %187 = vmatprep.subr.mxu0 0.0
    %188 = vmatpush1.msra.mxu0 0.0
    %189 = vmatprep.subr.mxu0 0.0
    %190 = vmatpush1.msra.mxu0 0.0
    %191 = vmatprep.subr.mxu0 0.0
    %192 = vmatpush1.msra.mxu0 0.0
    %193 = vmatprep.subr.mxu0 0.0
    %194 = vmatpush1.msra.mxu0 0.0
    %195 = vmatprep.mubr.f32.mxu0 0.0
    %196 = vmatmul.mubr.f32.gmra.mrb[0].mxu0 %v107
    %v197 = vpop.f32.mrb[0].mxu0
    %v198 = vadd.f32 %v129, %v197
    %v199 = vpop.f32.mrb[0].mxu0
    %200 = vdwg.mxu0
    %201 = vmax.xlane.f32.xlu0 %v198
    %v202 = vpop.xlane.xlu0 %201
    %v203 = vsub.f32 %v198, %v202
    %v204 = vmul.f32 %v203, 1.442695
    %v205 = vpow.pop %v204
    %206 = vadd.xlane.f32.xlu0 %v205
    %v207 = vpop.xlane.xlu0 %206
    %v208 = vrcp.pop %v207
    %v209 = vmul.f32 %v205, %v208
    %210 = vst [vmem:[#allocation2] sm:$0xff] %v209
    // Predicated region
    $region22: #{classifier_forward.1} parent=1 // pred_check
      _
    $region23: #{classifier_forward.1} parent=1 // pred_check_branch
      %212 = sbr.rel (0) target = $region25
    $region24: #{classifier_forward.1} parent=1 // pred_region
      %s214 = ssub.s32 128, 128
      %215 = vsyncadd [#allocation3], %s214
      %s217 = sshll.u32 [#allocation2], 4
      %s218 = int_to_ptr.vmem [resolvable:$true] %s217
      %220 = dma.vmem_to_hbm [thread:$0]  %s218, 128, %s5, [#allocation3]
    $region25: #{classifier_forward.1} parent=1 // pred_fallthru
      _
    // Predicated region
    $region26: #{classifier_forward.1} parent=1 // pred_check
      _
    $region27: #{classifier_forward.1} parent=1 // pred_check_branch
      %222 = sbr.rel (0) target = $region29
    $region28: #{classifier_forward.1} parent=1 // pred_region
      %223 = dma.done [#allocation3], 128
    $region29: #{classifier_forward.1} parent=1 // pred_fallthru
      _
    %224 = vsyncpa [#allocation3], 1

</llo_original>
